<compile_context>
chip_gen: v7x
topology: tpu7x:2x2x1
jax: 0.10.0
libtpu: 0.0.40
codegen_flags: <defaults>
</compile_context>

<pallas_src>
import jax
import jax.numpy as jnp
from jax.experimental import pallas as pl
from jax.experimental.pallas import tpu as pltpu

TASK_DIM = 2    # task_embedding_dim
HIDDEN = 128    # hidden_size


def _pick_tile(dim, max_tile):
    """Largest lane-friendly tile <= max_tile.

    Prefers a multiple of 128 that divides `dim` (unmasked stores, no compute
    on padded lanes); otherwise falls back to max_tile (Pallas masks the
    partial last tile: correct, slightly slower)."""
    if dim <= max_tile:
        return dim
    start = (max_tile // 128) * 128
    for t in range(start, 127, -128):
        if dim % t == 0:
            return t
    return max_tile


def _make_kernel(n_n, n_d, steps):
    """Kernel closure over static tile counts (n_n weight tiles, n_d bias tiles)."""

    def kernel(xT_ref, pa_ref, pb_ref, wb2_ref, bb2_ref, wT_ref, b_ref):
        # pa_ref: (128, 5) columns = [w1^T (2) | b1 | b2(pad) | mean(pad)]
        # pb_ref: (5, 128) rows    = [w2^T (2) ; wb1 (2) ; bb1]
        i = pl.program_id(0)

        def weight_path():
            xT = xT_ref[...].astype(jnp.float32)                 # (2, tile_n)
            # weight_generator Linear(2,128): K=2 -> VPU broadcast FMAs.
            h = (pa_ref[:, 0:1] * xT[0:1, :]
                 + pa_ref[:, 1:2] * xT[1:2, :]
                 + pa_ref[:, 2:3])                               # (128, tile_n)
            h = jnp.maximum(h, 0.0)
            # weight_generator Linear(128,2): K=128 -> MXU, (2, tile_n) lane-dense.
            wT = jnp.dot(pb_ref[0:2, :], h,
                         preferred_element_type=jnp.float32) + pa_ref[0:2, 3:4]
            wT_ref[...] = wT.astype(wT_ref.dtype)

        def bias_path():
            # Recompute the (1,128) hidden per step (~256 VPU FLOPs, free) so
            # there is no cross-step scratch dependency.
            m0 = pa_ref[0:1, 4:5]                                # (1, 1)
            m1 = pa_ref[1:2, 4:5]                                # (1, 1)
            hb = m0 * pb_ref[2:3, :] + m1 * pb_ref[3:4, :] + pb_ref[4:5, :]
            hb = jnp.maximum(hb, 0.0)                            # (1, 128)
            # bias_generator Linear(128, input_dim): MXU, bf16 wb2 stream,
            # f32 accumulation.
            b = jnp.dot(hb.astype(wb2_ref.dtype), wb2_ref[...],
                        preferred_element_type=jnp.float32) + bb2_ref[...]
            b_ref[...] = b.astype(b_ref.dtype)

        if n_n < steps:
            pl.when(i < n_n)(weight_path)
        else:
            weight_path()
        if n_d < steps:
            pl.when(i < n_d)(bias_path)
        else:
            bias_path()

    return kernel


def hypernet_forward(inputs, params, input_dim, output_dim, *,
                     max_n_tile=512, max_d_tile=2048,
                     wb2_dtype=jnp.bfloat16):
    """inputs: (N, 2) with N*2 == input_dim*output_dim. Returns (weight, bias)."""
    N, t = inputs.shape
    assert t == TASK_DIM and N * TASK_DIM == input_dim * output_dim
    w1, b1, w2, b2, wb1, bb1, wb2, bb2 = params

    tile_n = _pick_tile(N, max_n_tile)
    tile_d = _pick_tile(input_dim, max_d_tile)
    n_n = pl.cdiv(N, tile_n)
    n_d = pl.cdiv(input_dim, tile_d)
    steps = max(n_n, n_d)

    # ---- packed small operands (cuts 9 input streams down to 5) ----------
    # Column pack (128, 5): [w1^T | b1 | b2 (zero-padded) | mean (zero-padded)].
    # NOTE: the first 4 columns are constant params and could be pre-packed
    # once; only the mean column is data-dependent (tiny concat, negligible).
    m = jnp.mean(inputs.astype(jnp.float32), axis=0)             # (2,)
    zpad = jnp.zeros((HIDDEN - TASK_DIM,), jnp.float32)
    pa = jnp.concatenate(
        [w1.T,                                                   # (128, 2)
         b1.reshape(HIDDEN, 1),
         jnp.concatenate([b2, zpad]).reshape(HIDDEN, 1),
         jnp.concatenate([m, zpad]).reshape(HIDDEN, 1)], axis=1)  # (128, 5)
    # Row pack (5, 128): [w2^T ; wb1 ; bb1].
    pb = jnp.concatenate([w2.T, wb1, bb1.reshape(1, HIDDEN)], axis=0)  # (5, 128)

    wb2_s = wb2.astype(wb2_dtype)                                # (128, input_dim)
    bb2r = bb2.reshape(1, input_dim)

    def clamped(n):
        if n == steps:
            return lambda i: (0, i)
        return lambda i: (0, jnp.minimum(i, n - 1))

    full = lambda shape: pl.BlockSpec(shape, lambda i: (0, 0))

    wT, bias2d = pl.pallas_call(
        _make_kernel(n_n, n_d, steps),
        out_shape=(
            jax.ShapeDtypeStruct((TASK_DIM, N), jnp.float32),
            jax.ShapeDtypeStruct((1, input_dim), jnp.float32),
        ),
        grid=(steps,),
        in_specs=[
            pl.BlockSpec((TASK_DIM, tile_n), clamped(n_n)),      # x^T tile
            full((HIDDEN, 5)),                                   # column pack
            full((5, HIDDEN)),                                   # row pack
            pl.BlockSpec((HIDDEN, tile_d), clamped(n_d)),        # wb2 tile
            pl.BlockSpec((1, tile_d), clamped(n_d)),             # bb2 tile
        ],
        out_specs=(
            pl.BlockSpec((TASK_DIM, tile_n), clamped(n_n)),      # w^T tile
            pl.BlockSpec((1, tile_d), clamped(n_d)),             # bias tile
        ),
        compiler_params=pltpu.CompilerParams(
            # Clamped index maps + guarded writes require a sequential axis.
            dimension_semantics=("arbitrary",),
        ),
    )(inputs.T, pa, pb, wb2_s, bb2r)

    weight = wT.T.reshape(input_dim, output_dim)
    bias = bias2d.reshape(input_dim)
    return weight, bias


def init_hypernet_params(key, input_dim, std=0.01):
    """Equivalent of init_linear_layer: normal(std) weights, zero biases.
    Weights are stored (in_features, out_features)."""
    k1, k2, k3, k4 = jax.random.split(key, 4)
    w1 = jax.random.normal(k1, (TASK_DIM, HIDDEN), jnp.float32) * std
    b1 = jnp.zeros((HIDDEN,), jnp.float32)
    w2 = jax.random.normal(k2, (HIDDEN, TASK_DIM), jnp.float32) * std
    b2 = jnp.zeros((TASK_DIM,), jnp.float32)
    wb1 = jax.random.normal(k3, (TASK_DIM, HIDDEN), jnp.float32) * std
    bb1 = jnp.zeros((HIDDEN,), jnp.float32)
    wb2 = jax.random.normal(k4, (HIDDEN, input_dim), jnp.float32) * std
    bb2 = jnp.zeros((input_dim,), jnp.float32)
    return (w1, b1, w2, b2, wb1, bb1, wb2, bb2)


def hypernet_reference(inputs, params, input_dim, output_dim):
    """Pure-JAX f32 reference for correctness check."""
    w1, b1, w2, b2, wb1, bb1, wb2, bb2 = params
    h = jnp.maximum(inputs @ w1 + b1, 0.0)
    weight = (h @ w2 + b2).reshape(input_dim, output_dim)
    m = jnp.mean(inputs, axis=0)
    hb = jnp.maximum(m @ wb1 + bb1, 0.0)
    bias = (hb @ wb2 + bb2).reshape(input_dim)
    return weight, bias


def _run_case(key, input_dim, output_dim):
    N = (input_dim * output_dim) // TASK_DIM
    k_in, k_par = jax.random.split(key)
    inputs = jax.random.normal(k_in, (N, TASK_DIM), jnp.float32)
    params = init_hypernet_params(k_par, input_dim)

    weight, bias = hypernet_forward(inputs, params, input_dim, output_dim)
    jax.block_until_ready((weight, bias))

    w_ref, b_ref = hypernet_reference(inputs, params, input_dim, output_dim)
    assert weight.shape == (input_dim, output_dim)
    assert bias.shape == (input_dim,)
    # Weight path is full f32; bias path streams wb2 in bf16 (f32 accumulate).
    assert jnp.allclose(weight, w_ref, atol=1e-5, rtol=1e-5)
    assert jnp.allclose(bias, b_ref, atol=5e-5, rtol=1e-2)


if __name__ == "__main__":
    key = jax.random.PRNGKey(0)
    k_small, k_big = jax.random.split(key)

    # Demo-scale case (matches the PyTorch module's typical adapter sizes):
    # weight has input_dim*output_dim = 32 elems, inputs are (16, 2).
    _run_case(k_small, input_dim=4, output_dim=8)

    # Larger case exercising both tiled paths of the combined grid:
    # N = 4096 -> 8 weight tiles of 512; input_dim = 4096 -> 2 bias tiles of 2048.
    _run_case(k_big, input_dim=4096, output_dim=2)

    print("KERNEL_OK")
</pallas_src>

<mosaic_0001>
module attributes {stable_mosaic.version = 11 : i64} {
  func.func @kernel(%arg0: i32, %arg1: memref<2x16xf32, #tpu.memory_space<vmem>>, %arg2: memref<128x5xf32, #tpu.memory_space<vmem>>, %arg3: memref<5x128xf32, #tpu.memory_space<vmem>>, %arg4: memref<128x4xbf16, #tpu.memory_space<vmem>>, %arg5: memref<1x4xf32, #tpu.memory_space<vmem>>, %arg6: memref<2x16xf32, #tpu.memory_space<vmem>>, %arg7: memref<1x4xf32, #tpu.memory_space<vmem>>) attributes {dimension_semantics = [#tpu.dimension_semantics<arbitrary>], iteration_bounds = array<i64: 1>, scalar_prefetch = 0 : i64, scratch_operands = 0 : i64, tpu.core_type = #tpu.core_type<tc>, window_params = [{transform_indices = @transform_0, window_bounds = array<i64: 2, 16>}, {pipeline_mode = #tpu.pipeline_mode<synchronous>, transform_indices = @transform_1, window_bounds = array<i64: 128, 5>}, {pipeline_mode = #tpu.pipeline_mode<synchronous>, transform_indices = @transform_2, window_bounds = array<i64: 5, 128>}, {transform_indices = @transform_3, window_bounds = array<i64: 128, 4>}, {transform_indices = @transform_4, window_bounds = array<i64: 1, 4>}, {transform_indices = @transform_5, window_bounds = array<i64: 2, 16>}, {transform_indices = @transform_6, window_bounds = array<i64: 1, 4>}]} {
    %c0 = arith.constant 0 : index
    %c0_0 = arith.constant 0 : index
    %0 = vector.load %arg1[%c0, %c0_0] : memref<2x16xf32, #tpu.memory_space<vmem>>, vector<2x16xf32>
    %c0_1 = arith.constant 0 : index
    %c0_2 = arith.constant 0 : index
    %1 = vector.load %arg2[%c0_1, %c0_2] : memref<128x5xf32, #tpu.memory_space<vmem>>, vector<128x1xf32>
    %2 = vector.extract_strided_slice %0 {offsets = [0, 0], sizes = [1, 16], strides = [1, 1]} : vector<2x16xf32> to vector<1x16xf32>
    %3 = vector.broadcast %1 : vector<128x1xf32> to vector<128x16xf32>
    %4 = vector.broadcast %2 : vector<1x16xf32> to vector<128x16xf32>
    %5 = arith.mulf %3, %4 : vector<128x16xf32>
    %c0_3 = arith.constant 0 : index
    %c1 = arith.constant 1 : index
    %6 = vector.load %arg2[%c0_3, %c1] : memref<128x5xf32, #tpu.memory_space<vmem>>, vector<128x1xf32>
    %7 = vector.extract_strided_slice %0 {offsets = [1, 0], sizes = [1, 16], strides = [1, 1]} : vector<2x16xf32> to vector<1x16xf32>
    %8 = vector.broadcast %6 : vector<128x1xf32> to vector<128x16xf32>
    %9 = vector.broadcast %7 : vector<1x16xf32> to vector<128x16xf32>
    %10 = arith.mulf %8, %9 : vector<128x16xf32>
    %11 = arith.addf %5, %10 : vector<128x16xf32>
    %c0_4 = arith.constant 0 : index
    %c2 = arith.constant 2 : index
    %12 = vector.load %arg2[%c0_4, %c2] : memref<128x5xf32, #tpu.memory_space<vmem>>, vector<128x1xf32>
    %13 = vector.broadcast %12 : vector<128x1xf32> to vector<128x16xf32>
    %14 = arith.addf %11, %13 : vector<128x16xf32>
    %cst = arith.constant 0.000000e+00 : f32
    %15 = vector.broadcast %cst : f32 to vector<128x16xf32>
    %16 = arith.maximumf %14, %15 : vector<128x16xf32>
    %c0_5 = arith.constant 0 : index
    %c0_6 = arith.constant 0 : index
    %17 = vector.load %arg3[%c0_5, %c0_6] : memref<5x128xf32, #tpu.memory_space<vmem>>, vector<2x128xf32>
    %cst_7 = arith.constant dense<0.000000e+00> : vector<2x16xf32>
    %18 = tpu.matmul %17, %16, %cst_7 {dimension_numbers = #tpu.dot_dimension_numbers<[1], [0], [0], [1], [0, 0, 1, 1], [], []>} : vector<2x128xf32>, vector<128x16xf32>, vector<2x16xf32> -> vector<2x16xf32>
    %c0_8 = arith.constant 0 : index
    %c3 = arith.constant 3 : index
    %19 = vector.load %arg2[%c0_8, %c3] : memref<128x5xf32, #tpu.memory_space<vmem>>, vector<2x1xf32>
    %20 = vector.broadcast %19 : vector<2x1xf32> to vector<2x16xf32>
    %21 = arith.addf %18, %20 : vector<2x16xf32>
    %c0_9 = arith.constant 0 : index
    %c0_10 = arith.constant 0 : index
    %22 = vector.load %arg6[%c0_9, %c0_10] : memref<2x16xf32, #tpu.memory_space<vmem>>, vector<2x16xf32>
    tpu.vector_store %arg6[%c0_9, %c0_10], %21 {strides = array<i32>} : memref<2x16xf32, #tpu.memory_space<vmem>>, vector<2x16xf32>,
    %c0_11 = arith.constant 0 : index
    %c4 = arith.constant 4 : index
    %23 = vector.load %arg2[%c0_11, %c4] : memref<128x5xf32, #tpu.memory_space<vmem>>, vector<1x1xf32>
    %c1_12 = arith.constant 1 : index
    %c4_13 = arith.constant 4 : index
    %24 = vector.load %arg2[%c1_12, %c4_13] : memref<128x5xf32, #tpu.memory_space<vmem>>, vector<1x1xf32>
    %c2_14 = arith.constant 2 : index
    %c0_15 = arith.constant 0 : index
    %25 = vector.load %arg3[%c2_14, %c0_15] : memref<5x128xf32, #tpu.memory_space<vmem>>, vector<1x128xf32>
    %26 = vector.broadcast %23 : vector<1x1xf32> to vector<1x128xf32>
    %27 = arith.mulf %26, %25 : vector<1x128xf32>
    %c3_16 = arith.constant 3 : index
    %c0_17 = arith.constant 0 : index
    %28 = vector.load %arg3[%c3_16, %c0_17] : memref<5x128xf32, #tpu.memory_space<vmem>>, vector<1x128xf32>
    %29 = vector.broadcast %24 : vector<1x1xf32> to vector<1x128xf32>
    %30 = arith.mulf %29, %28 : vector<1x128xf32>
    %31 = arith.addf %27, %30 : vector<1x128xf32>
    %c4_18 = arith.constant 4 : index
    %c0_19 = arith.constant 0 : index
    %32 = vector.load %arg3[%c4_18, %c0_19] : memref<5x128xf32, #tpu.memory_space<vmem>>, vector<1x128xf32>
    %33 = arith.addf %31, %32 : vector<1x128xf32>
    %cst_20 = arith.constant 0.000000e+00 : f32
    %34 = vector.broadcast %cst_20 : f32 to vector<1x128xf32>
    %35 = arith.maximumf %33, %34 : vector<1x128xf32>
    %36 = arith.truncf %35 : vector<1x128xf32> to vector<1x128xbf16>
    %c0_21 = arith.constant 0 : index
    %c0_22 = arith.constant 0 : index
    %37 = vector.load %arg4[%c0_21, %c0_22] : memref<128x4xbf16, #tpu.memory_space<vmem>>, vector<128x4xbf16>
    %cst_23 = arith.constant dense<0.000000e+00> : vector<1x4xf32>
    %38 = tpu.matmul %36, %37, %cst_23 {dimension_numbers = #tpu.dot_dimension_numbers<[1], [0], [0], [1], [0, 0, 1, 1], [], []>} : vector<1x128xbf16>, vector<128x4xbf16>, vector<1x4xf32> -> vector<1x4xf32>
    %c0_24 = arith.constant 0 : index
    %c0_25 = arith.constant 0 : index
    %39 = vector.load %arg5[%c0_24, %c0_25] : memref<1x4xf32, #tpu.memory_space<vmem>>, vector<1x4xf32>
    %40 = arith.addf %38, %39 : vector<1x4xf32>
    %c0_26 = arith.constant 0 : index
    %c0_27 = arith.constant 0 : index
    %41 = vector.load %arg7[%c0_26, %c0_27] : memref<1x4xf32, #tpu.memory_space<vmem>>, vector<1x4xf32>
    tpu.vector_store %arg7[%c0_26, %c0_27], %40 {strides = array<i32>} : memref<1x4xf32, #tpu.memory_space<vmem>>, vector<1x4xf32>,
    return
  }
  func.func @transform_0(%arg0: i32) -> (i32, i32) {
    %c0_i32 = arith.constant 0 : i32
    %c0_i32_0 = arith.constant 0 : i32
    return %c0_i32, %arg0 : i32, i32
  }
  func.func @transform_1(%arg0: i32) -> (i32, i32) {
    %c0_i32 = arith.constant 0 : i32
    %c0_i32_0 = arith.constant 0 : i32
    %c0_i32_1 = arith.constant 0 : i32
    return %c0_i32, %c0_i32_0 : i32, i32
  }
  func.func @transform_2(%arg0: i32) -> (i32, i32) {
    %c0_i32 = arith.constant 0 : i32
    %c0_i32_0 = arith.constant 0 : i32
    %c0_i32_1 = arith.constant 0 : i32
    return %c0_i32, %c0_i32_0 : i32, i32
  }
  func.func @transform_3(%arg0: i32) -> (i32, i32) {
    %c0_i32 = arith.constant 0 : i32
    %c0_i32_0 = arith.constant 0 : i32
    return %c0_i32, %arg0 : i32, i32
  }
  func.func @transform_4(%arg0: i32) -> (i32, i32) {
    %c0_i32 = arith.constant 0 : i32
    %c0_i32_0 = arith.constant 0 : i32
    return %c0_i32, %arg0 : i32, i32
  }
  func.func @transform_5(%arg0: i32) -> (i32, i32) {
    %c0_i32 = arith.constant 0 : i32
    %c0_i32_0 = arith.constant 0 : i32
    return %c0_i32, %arg0 : i32, i32
  }
  func.func @transform_6(%arg0: i32) -> (i32, i32) {
    %c0_i32 = arith.constant 0 : i32
    %c0_i32_0 = arith.constant 0 : i32
    return %c0_i32, %arg0 : i32, i32
  }
}

</mosaic_0001>

<llo_original>
// kernel: tpu_custom_call.1
$region0: #{tpu_custom_call.1}
  #allocation0 [shape = 'u32[]', space=smem, size = 0x4, offset = 0x4, fixed_abs, tag = 'smem constant byte address 0x4 - core index']
  #allocation1 [shape = 'u32[144,128]{1,0:T(1,128)}', space=vmem, size = 0x12000, scoped, tag = 'internal scratch']
  %s0 = inlined_call_operand.vmem [shape: f32[2,16], index: 0, kind: input, shape index: {}]
  %s1 = inlined_call_operand.vmem [shape: f32[128,5], index: 1, kind: input, shape index: {}]
  %s2 = inlined_call_operand.vmem [shape: f32[5,128], index: 2, kind: input, shape index: {}]
  %s3 = inlined_call_operand.vmem [shape: bf16[128,4], index: 3, kind: input, shape index: {}]
  %s4 = inlined_call_operand.vmem [shape: f32[1,4], index: 4, kind: input, shape index: {}]
  %s5 = inlined_call_operand.hbm [shape: f32[2,16], index: 5, kind: output, shape index: {0}]
  %s6 = inlined_call_operand.hbm [shape: f32[1,4], index: 6, kind: output, shape index: {1}]
  %7 = xla_tuple %s5, %s6
  %s8 = sld [smem:[#allocation0]]
  $region38: #{tpu_custom_call.1} parent=0
    _
  %s10 = ssub.s32 1, %s8
  %s11 = scalar_select 0, %s10, %s8
  $region1: #{tpu_custom_call.1} parent=0
    #allocation2 [shape = 'u8[1024]{0}', space=vmem, size = 0x400, scoped, tag = 'output window, operand 0, single buffered']
    #allocation3 [shape = 's32[1]{0}', space=sflag, size = 0x4, scoped, tag = 'scoped memory for tpu_custom_call.1']
    #allocation4 [shape = 'u8[512]{0}', space=vmem, size = 0x400, scoped, tag = 'output window, operand 1, single buffered']
    #allocation5 [shape = 's32[1]{0}', space=sflag, size = 0x4, scoped, tag = 'scoped memory for tpu_custom_call.1']
    %12 = vsyncpa [#allocation3], 0
    %13 = vsyncpa [#allocation5], 0
    // Predicated region
    $region2: #{tpu_custom_call.1} parent=1 // pred_check
      _
    $region3: #{tpu_custom_call.1} parent=1 // pred_check_branch
      %15 = sbr.rel (0) target = $region5
    $region4: #{tpu_custom_call.1} parent=1 // pred_region
      _
    $region5: #{tpu_custom_call.1} parent=1 // pred_fallthru
      _
    // Predicated region
    $region6: #{tpu_custom_call.1} parent=1 // pred_check
      _
    $region7: #{tpu_custom_call.1} parent=1 // pred_check_branch
      %17 = sbr.rel (0) target = $region9
    $region8: #{tpu_custom_call.1} parent=1 // pred_region
      _
    $region9: #{tpu_custom_call.1} parent=1 // pred_fallthru
      _
    // Predicated region
    $region10: #{tpu_custom_call.1} parent=1 // pred_check
      _
    $region11: #{tpu_custom_call.1} parent=1 // pred_check_branch
      %19 = sbr.rel (0) target = $region13
    $region12: #{tpu_custom_call.1} parent=1 // pred_region
      _
    $region13: #{tpu_custom_call.1} parent=1 // pred_fallthru
      _
    // Predicated region
    $region14: #{tpu_custom_call.1} parent=1 // pred_check
      _
    $region15: #{tpu_custom_call.1} parent=1 // pred_check_branch
      %21 = sbr.rel (0) target = $region17
    $region16: #{tpu_custom_call.1} parent=1 // pred_region
      _
    $region17: #{tpu_custom_call.1} parent=1 // pred_fallthru
      _
    // Predicated region
    $region18: #{tpu_custom_call.1} parent=1 // pred_check
      _
    $region19: #{tpu_custom_call.1} parent=1 // pred_check_branch
      %23 = sbr.rel (0) target = $region21
    $region20: #{tpu_custom_call.1} parent=1 // pred_region
      _
    $region21: #{tpu_custom_call.1} parent=1 // pred_fallthru
      _
    %v25 = vld [vmem:[%s0] sm:$0x3]
    %v26 = vld [vmem:[%s1] sm:$0xff]
    %v27 = vld [vmem:[%s1 + $0x8] sm:$0xff]
    %v28 = vld [vmem:[%s1 + $0x10] sm:$0xff]
    %v29 = vld [vmem:[%s1 + $0x18] sm:$0xff]
    %v30 = vld [vmem:[%s1 + $0x20] sm:$0xff]
    %v31 = vld [vmem:[%s1 + $0x28] sm:$0xff]
    %v32 = vld [vmem:[%s1 + $0x30] sm:$0xff]
    %v33 = vld [vmem:[%s1 + $0x38] sm:$0xff]
    %v34 = vld [vmem:[%s1 + $0x40] sm:$0xff]
    %v35 = vld [vmem:[%s1 + $0x48] sm:$0xff]
    %v36 = vld [vmem:[%s1 + $0x50] sm:$0xff]
    %v37 = vld [vmem:[%s1 + $0x58] sm:$0xff]
    %v38 = vld [vmem:[%s1 + $0x60] sm:$0xff]
    %v39 = vld [vmem:[%s1 + $0x68] sm:$0xff]
    %v40 = vld [vmem:[%s1 + $0x70] sm:$0xff]
    %v41 = vld [vmem:[%s1 + $0x78] sm:$0xff]
    %43 = vset.pattern.permute.xlu0 0
    %44 = vperm.xlu0 %43, %v26
    %v45 = vpop.permute.xlu0 %44
    %48 = vset.pattern.permute.xlu0 0
    %49 = vperm.xlu0 %48, %v27
    %v50 = vpop.permute.xlu0 %49
    %53 = vset.pattern.permute.xlu0 0
    %54 = vperm.xlu0 %53, %v28
    %v55 = vpop.permute.xlu0 %54
    %58 = vset.pattern.permute.xlu0 0
    %59 = vperm.xlu0 %58, %v29
    %v60 = vpop.permute.xlu0 %59
    %63 = vset.pattern.permute.xlu0 0
    %64 = vperm.xlu0 %63, %v30
    %v65 = vpop.permute.xlu0 %64
    %68 = vset.pattern.permute.xlu0 0
    %69 = vperm.xlu0 %68, %v31
    %v70 = vpop.permute.xlu0 %69
    %73 = vset.pattern.permute.xlu0 0
    %74 = vperm.xlu0 %73, %v32
    %v75 = vpop.permute.xlu0 %74
    %78 = vset.pattern.permute.xlu0 0
    %79 = vperm.xlu0 %78, %v33
    %v80 = vpop.permute.xlu0 %79
    %83 = vset.pattern.permute.xlu0 0
    %84 = vperm.xlu0 %83, %v34
    %v85 = vpop.permute.xlu0 %84
    %88 = vset.pattern.permute.xlu0 0
    %89 = vperm.xlu0 %88, %v35
    %v90 = vpop.permute.xlu0 %89
    %93 = vset.pattern.permute.xlu0 0
    %94 = vperm.xlu0 %93, %v36
    %v95 = vpop.permute.xlu0 %94
    %98 = vset.pattern.permute.xlu0 0
    %99 = vperm.xlu0 %98, %v37
    %v100 = vpop.permute.xlu0 %99
    %103 = vset.pattern.permute.xlu0 0
    %104 = vperm.xlu0 %103, %v38
    %v105 = vpop.permute.xlu0 %104
    %108 = vset.pattern.permute.xlu0 0
    %109 = vperm.xlu0 %108, %v39
    %v110 = vpop.permute.xlu0 %109
    %113 = vset.pattern.permute.xlu0 0
    %114 = vperm.xlu0 %113, %v40
    %v115 = vpop.permute.xlu0 %114
    %118 = vset.pattern.permute.xlu0 0
    %119 = vperm.xlu0 %118, %v41
    %v120 = vpop.permute.xlu0 %119
    %v122 = vlaneseq
    %v123 = vshrl.u32 %v122, 7
    %v124 = vsub.s32 0, %v123
    %v125 = vrot.slane %v25, %v124
    %v126 = vmul.f32 %v45, %v125
    %v127 = vmul.f32 %v50, %v125
    %v128 = vmul.f32 %v55, %v125
    %v129 = vmul.f32 %v60, %v125
    %v130 = vmul.f32 %v65, %v125
    %v131 = vmul.f32 %v70, %v125
    %v132 = vmul.f32 %v75, %v125
    %v133 = vmul.f32 %v80, %v125
    %v134 = vmul.f32 %v85, %v125
    %v135 = vmul.f32 %v90, %v125
    %v136 = vmul.f32 %v95, %v125
    %v137 = vmul.f32 %v100, %v125
    %v138 = vmul.f32 %v105, %v125
    %v139 = vmul.f32 %v110, %v125
    %v140 = vmul.f32 %v115, %v125
    %v141 = vmul.f32 %v120, %v125
    %142 = vset.pattern.permute.xlu0 1
    %143 = vperm.xlu0 %142, %v26
    %v144 = vpop.permute.xlu0 %143
    %146 = vset.pattern.permute.xlu0 1
    %147 = vperm.xlu0 %146, %v27
    %v148 = vpop.permute.xlu0 %147
    %150 = vset.pattern.permute.xlu0 1
    %151 = vperm.xlu0 %150, %v28
    %v152 = vpop.permute.xlu0 %151
    %154 = vset.pattern.permute.xlu0 1
    %155 = vperm.xlu0 %154, %v29
    %v156 = vpop.permute.xlu0 %155
    %158 = vset.pattern.permute.xlu0 1
    %159 = vperm.xlu0 %158, %v30
    %v160 = vpop.permute.xlu0 %159
    %162 = vset.pattern.permute.xlu0 1
    %163 = vperm.xlu0 %162, %v31
    %v164 = vpop.permute.xlu0 %163
    %166 = vset.pattern.permute.xlu0 1
    %167 = vperm.xlu0 %166, %v32
    %v168 = vpop.permute.xlu0 %167
    %170 = vset.pattern.permute.xlu0 1
    %171 = vperm.xlu0 %170, %v33
    %v172 = vpop.permute.xlu0 %171
    %174 = vset.pattern.permute.xlu0 1
    %175 = vperm.xlu0 %174, %v34
    %v176 = vpop.permute.xlu0 %175
    %178 = vset.pattern.permute.xlu0 1
    %179 = vperm.xlu0 %178, %v35
    %v180 = vpop.permute.xlu0 %179
    %182 = vset.pattern.permute.xlu0 1
    %183 = vperm.xlu0 %182, %v36
    %v184 = vpop.permute.xlu0 %183
    %186 = vset.pattern.permute.xlu0 1
    %187 = vperm.xlu0 %186, %v37
    %v188 = vpop.permute.xlu0 %187
    %190 = vset.pattern.permute.xlu0 1
    %191 = vperm.xlu0 %190, %v38
    %v192 = vpop.permute.xlu0 %191
    %194 = vset.pattern.permute.xlu0 1
    %195 = vperm.xlu0 %194, %v39
    %v196 = vpop.permute.xlu0 %195
    %198 = vset.pattern.permute.xlu0 1
    %199 = vperm.xlu0 %198, %v40
    %v200 = vpop.permute.xlu0 %199
    %202 = vset.pattern.permute.xlu0 1
    %203 = vperm.xlu0 %202, %v41
    %v204 = vpop.permute.xlu0 %203
    %v206 = vlaneseq
    %v207 = vshrl.u32 %v206, 7
    %v208 = vsub.s32 1, %v207
    %v209 = vrot.slane %v25, %v208
    %v210 = vmul.f32 %v144, %v209
    %v211 = vmul.f32 %v148, %v209
    %v212 = vmul.f32 %v152, %v209
    %v213 = vmul.f32 %v156, %v209
    %v214 = vmul.f32 %v160, %v209
    %v215 = vmul.f32 %v164, %v209
    %v216 = vmul.f32 %v168, %v209
    %v217 = vmul.f32 %v172, %v209
    %v218 = vmul.f32 %v176, %v209
    %v219 = vmul.f32 %v180, %v209
    %v220 = vmul.f32 %v184, %v209
    %v221 = vmul.f32 %v188, %v209
    %v222 = vmul.f32 %v192, %v209
    %v223 = vmul.f32 %v196, %v209
    %v224 = vmul.f32 %v200, %v209
    %v225 = vmul.f32 %v204, %v209
    %v226 = vadd.f32 %v126, %v210
    %v227 = vadd.f32 %v127, %v211
    %v228 = vadd.f32 %v128, %v212
    %v229 = vadd.f32 %v129, %v213
    %v230 = vadd.f32 %v130, %v214
    %v231 = vadd.f32 %v131, %v215
    %v232 = vadd.f32 %v132, %v216
    %v233 = vadd.f32 %v133, %v217
    %v234 = vadd.f32 %v134, %v218
    %v235 = vadd.f32 %v135, %v219
    %v236 = vadd.f32 %v136, %v220
    %v237 = vadd.f32 %v137, %v221
    %v238 = vadd.f32 %v138, %v222
    %v239 = vadd.f32 %v139, %v223
    %v240 = vadd.f32 %v140, %v224
    %v241 = vadd.f32 %v141, %v225
    %242 = vset.pattern.permute.xlu0 2
    %243 = vperm.xlu0 %242, %v26
    %v244 = vpop.permute.xlu0 %243
    %246 = vset.pattern.permute.xlu0 2
    %247 = vperm.xlu0 %246, %v27
    %v248 = vpop.permute.xlu0 %247
    %250 = vset.pattern.permute.xlu0 2
    %251 = vperm.xlu0 %250, %v28
    %v252 = vpop.permute.xlu0 %251
    %254 = vset.pattern.permute.xlu0 2
    %255 = vperm.xlu0 %254, %v29
    %v256 = vpop.permute.xlu0 %255
    %258 = vset.pattern.permute.xlu0 2
    %259 = vperm.xlu0 %258, %v30
    %v260 = vpop.permute.xlu0 %259
    %262 = vset.pattern.permute.xlu0 2
    %263 = vperm.xlu0 %262, %v31
    %v264 = vpop.permute.xlu0 %263
    %266 = vset.pattern.permute.xlu0 2
    %267 = vperm.xlu0 %266, %v32
    %v268 = vpop.permute.xlu0 %267
    %270 = vset.pattern.permute.xlu0 2
    %271 = vperm.xlu0 %270, %v33
    %v272 = vpop.permute.xlu0 %271
    %274 = vset.pattern.permute.xlu0 2
    %275 = vperm.xlu0 %274, %v34
    %v276 = vpop.permute.xlu0 %275
    %278 = vset.pattern.permute.xlu0 2
    %279 = vperm.xlu0 %278, %v35
    %v280 = vpop.permute.xlu0 %279
    %282 = vset.pattern.permute.xlu0 2
    %283 = vperm.xlu0 %282, %v36
    %v284 = vpop.permute.xlu0 %283
    %286 = vset.pattern.permute.xlu0 2
    %287 = vperm.xlu0 %286, %v37
    %v288 = vpop.permute.xlu0 %287
    %290 = vset.pattern.permute.xlu0 2
    %291 = vperm.xlu0 %290, %v38
    %v292 = vpop.permute.xlu0 %291
    %294 = vset.pattern.permute.xlu0 2
    %295 = vperm.xlu0 %294, %v39
    %v296 = vpop.permute.xlu0 %295
    %298 = vset.pattern.permute.xlu0 2
    %299 = vperm.xlu0 %298, %v40
    %v300 = vpop.permute.xlu0 %299
    %302 = vset.pattern.permute.xlu0 2
    %303 = vperm.xlu0 %302, %v41
    %v304 = vpop.permute.xlu0 %303
    %v306 = vadd.f32 %v226, %v244
    %v307 = vadd.f32 %v227, %v248
    %v308 = vadd.f32 %v228, %v252
    %v309 = vadd.f32 %v229, %v256
    %v310 = vadd.f32 %v230, %v260
    %v311 = vadd.f32 %v231, %v264
    %v312 = vadd.f32 %v232, %v268
    %v313 = vadd.f32 %v233, %v272
    %v314 = vadd.f32 %v234, %v276
    %v315 = vadd.f32 %v235, %v280
    %v316 = vadd.f32 %v236, %v284
    %v317 = vadd.f32 %v237, %v288
    %v318 = vadd.f32 %v238, %v292
    %v319 = vadd.f32 %v239, %v296
    %v320 = vadd.f32 %v240, %v300
    %v321 = vadd.f32 %v241, %v304
    %v322 = vmax.f32 %v306, 0.0
    %v323 = vmax.f32 %v307, 0.0
    %v324 = vmax.f32 %v308, 0.0
    %v325 = vmax.f32 %v309, 0.0
    %v326 = vmax.f32 %v310, 0.0
    %v327 = vmax.f32 %v311, 0.0
    %v328 = vmax.f32 %v312, 0.0
    %v329 = vmax.f32 %v313, 0.0
    %v330 = vmax.f32 %v314, 0.0
    %v331 = vmax.f32 %v315, 0.0
    %v332 = vmax.f32 %v316, 0.0
    %v333 = vmax.f32 %v317, 0.0
    %v334 = vmax.f32 %v318, 0.0
    %v335 = vmax.f32 %v319, 0.0
    %v336 = vmax.f32 %v320, 0.0
    %v337 = vmax.f32 %v321, 0.0
    %v338 = vld [vmem:[%s2] sm:$0x3]
    %v339 = vld [vmem:[%s1] sm:$0x3]
    %341 = vset.pattern.permute.xlu0 3
    %342 = vperm.xlu0 %341, %v339
    %v343 = vpop.permute.xlu0 %342
    %345 = vmatprep.subr.mxu0 0.0
    %346 = vmatpush1.msra.mxu0 %v322
    %347 = vmatprep.subr.mxu0 0.0
    %348 = vmatpush1.msra.mxu0 %v323
    %349 = vmatprep.subr.mxu0 0.0
    %350 = vmatpush1.msra.mxu0 %v324
    %351 = vmatprep.subr.mxu0 0.0
    %352 = vmatpush1.msra.mxu0 %v325
    %353 = vmatprep.subr.mxu0 0.0
    %354 = vmatpush1.msra.mxu0 %v326
    %355 = vmatprep.subr.mxu0 0.0
    %356 = vmatpush1.msra.mxu0 %v327
    %357 = vmatprep.subr.mxu0 0.0
    %358 = vmatpush1.msra.mxu0 %v328
    %359 = vmatprep.subr.mxu0 0.0
    %360 = vmatpush1.msra.mxu0 %v329
    %361 = vmatprep.subr.mxu0 0.0
    %362 = vmatpush1.msra.mxu0 %v330
    %363 = vmatprep.subr.mxu0 0.0
    %364 = vmatpush1.msra.mxu0 %v331
    %365 = vmatprep.subr.mxu0 0.0
    %366 = vmatpush1.msra.mxu0 %v332
    %367 = vmatprep.subr.mxu0 0.0
    %368 = vmatpush1.msra.mxu0 %v333
    %369 = vmatprep.subr.mxu0 0.0
    %370 = vmatpush1.msra.mxu0 %v334
    %371 = vmatprep.subr.mxu0 0.0
    %372 = vmatpush1.msra.mxu0 %v335
    %373 = vmatprep.subr.mxu0 0.0
    %374 = vmatpush1.msra.mxu0 %v336
    %375 = vmatprep.subr.mxu0 0.0
    %376 = vmatpush1.msra.mxu0 %v337
    %377 = vmatprep.subr.mxu0 0.0
    %378 = vmatpush1.msra.mxu0 0.0
    %379 = vmatprep.subr.mxu0 0.0
    %380 = vmatpush1.msra.mxu0 0.0
    %381 = vmatprep.subr.mxu0 0.0
    %382 = vmatpush1.msra.mxu0 0.0
    %383 = vmatprep.subr.mxu0 0.0
    %384 = vmatpush1.msra.mxu0 0.0
    %385 = vmatprep.subr.mxu0 0.0
    %386 = vmatpush1.msra.mxu0 0.0
    %387 = vmatprep.subr.mxu0 0.0
    %388 = vmatpush1.msra.mxu0 0.0
    %389 = vmatprep.subr.mxu0 0.0
    %390 = vmatpush1.msra.mxu0 0.0
    %391 = vmatprep.subr.mxu0 0.0
    %392 = vmatpush1.msra.mxu0 0.0
    %393 = vmatprep.subr.mxu0 0.0
    %394 = vmatpush1.msra.mxu0 0.0
    %395 = vmatprep.subr.mxu0 0.0
    %396 = vmatpush1.msra.mxu0 0.0
    %397 = vmatprep.subr.mxu0 0.0
    %398 = vmatpush1.msra.mxu0 0.0
    %399 = vmatprep.subr.mxu0 0.0
    %400 = vmatpush1.msra.mxu0 0.0
    %401 = vmatprep.subr.mxu0 0.0
    %402 = vmatpush1.msra.mxu0 0.0
    %403 = vmatprep.subr.mxu0 0.0
    %404 = vmatpush1.msra.mxu0 0.0
    %405 = vmatprep.subr.mxu0 0.0
    %406 = vmatpush1.msra.mxu0 0.0
    %407 = vmatprep.subr.mxu0 0.0
    %408 = vmatpush1.msra.mxu0 0.0
    %409 = vmatprep.mubr.f32.mxu0 0.0
    %410 = vmatmul.mubr.f32.gmra.mrb[0].mxu0 %v338
    %v411 = vpop.f32.mrb[0].mxu0
    %v412 = vadd.f32 %v343, %v411
    %v413 = vpop.f32.mrb[0].mxu0
    %414 = vdwg.mxu0
    %vm415 = vcmask 123904
    %416 = vst.msk [vmem:[#allocation2] sm:$0x3] %vm415, %v412
    %v417 = vld [vmem:[%s1] sm:$0x1]
    %v418 = vld [vmem:[%s1 + $0x1] sm:$0x1]
    %v419 = vld [vmem:[%s2 + $0x2] sm:$0x1]
    %421 = vset.pattern.permute.xlu0 4
    %422 = vperm.xlu0 %421, %v417
    %v423 = vpop.permute.xlu0 %422
    %v425 = vmul.f32 %v423, %v419
    %v426 = vld [vmem:[%s2 + $0x3] sm:$0x1]
    %428 = vset.pattern.permute.xlu0 4
    %429 = vperm.xlu0 %428, %v418
    %v430 = vpop.permute.xlu0 %429
    %v432 = vmul.f32 %v430, %v426
    %v433 = vadd.f32 %v425, %v432
    %v434 = vld [vmem:[%s2 + $0x4] sm:$0x1]
    %v435 = vadd.f32 %v433, %v434
    %v436 = vmax.f32 %v435, 0.0
    %v437 = vpack.c.bf16 %v436, %v436
    %v438 = vld [vmem:[%s3] sm:$0xf]
    %v439 = vld [vmem:[%s3 + $0x4] sm:$0xf]
    %v440 = vld [vmem:[%s3 + $0x8] sm:$0xf]
    %v441 = vld [vmem:[%s3 + $0xc] sm:$0xf]
    %v442 = vld [vmem:[%s3 + $0x10] sm:$0xf]
    %v443 = vld [vmem:[%s3 + $0x14] sm:$0xf]
    %v444 = vld [vmem:[%s3 + $0x18] sm:$0xf]
    %v445 = vld [vmem:[%s3 + $0x1c] sm:$0xf]
    %v446 = vld [vmem:[%s3 + $0x20] sm:$0xf]
    %v447 = vld [vmem:[%s3 + $0x24] sm:$0xf]
    %v448 = vld [vmem:[%s3 + $0x28] sm:$0xf]
    %v449 = vld [vmem:[%s3 + $0x2c] sm:$0xf]
    %v450 = vld [vmem:[%s3 + $0x30] sm:$0xf]
    %v451 = vld [vmem:[%s3 + $0x34] sm:$0xf]
    %v452 = vld [vmem:[%s3 + $0x38] sm:$0xf]
    %v453 = vld [vmem:[%s3 + $0x3c] sm:$0xf]
    %v454 = vld [vmem:[%s4] sm:$0x1]
    %v471 = vunpack.c.l.b16 %v438
    %v472 = vunpack.c.l.b16 %v439
    %v473 = vunpack.c.l.b16 %v440
    %v474 = vunpack.c.l.b16 %v441
    %v475 = vunpack.c.l.b16 %v442
    %v476 = vunpack.c.l.b16 %v443
    %v477 = vunpack.c.l.b16 %v444
    %v478 = vunpack.c.l.b16 %v445
    %v479 = vunpack.c.l.b16 %v446
    %v480 = vunpack.c.l.b16 %v447
    %v481 = vunpack.c.l.b16 %v448
    %v482 = vunpack.c.l.b16 %v449
    %v483 = vunpack.c.l.b16 %v450
    %v484 = vunpack.c.l.b16 %v451
    %v485 = vunpack.c.l.b16 %v452
    %v486 = vunpack.c.l.b16 %v453
    %v487 = vpack.c.b16 %v472, %v471
    %v488 = vpack.c.b16 %v474, %v473
    %v489 = vpack.c.b16 %v476, %v475
    %v490 = vpack.c.b16 %v478, %v477
    %v491 = vpack.c.b16 %v480, %v479
    %v492 = vpack.c.b16 %v482, %v481
    %v493 = vpack.c.b16 %v484, %v483
    %v494 = vpack.c.b16 %v486, %v485
    %503 = vmatprep.subr.bf16.mxu0 0
    %504 = vmatpush1.bf16.msra.mxu0 %v487
    %505 = vmatprep.subr.bf16.mxu0 0
    %506 = vmatpush1.bf16.msra.mxu0 %v488
    %507 = vmatprep.subr.bf16.mxu0 0
    %508 = vmatpush1.bf16.msra.mxu0 %v489
    %509 = vmatprep.subr.bf16.mxu0 0
    %510 = vmatpush1.bf16.msra.mxu0 %v490
    %511 = vmatprep.subr.bf16.mxu0 0
    %512 = vmatpush1.bf16.msra.mxu0 %v491
    %513 = vmatprep.subr.bf16.mxu0 0
    %514 = vmatpush1.bf16.msra.mxu0 %v492
    %515 = vmatprep.subr.bf16.mxu0 0
    %516 = vmatpush1.bf16.msra.mxu0 %v493
    %517 = vmatprep.subr.bf16.mxu0 0
    %518 = vmatpush1.bf16.msra.mxu0 %v494
    %519 = vmatprep.subr.bf16.mxu0 0
    %520 = vmatpush1.bf16.msra.mxu0 0
    %521 = vmatprep.subr.bf16.mxu0 0
    %522 = vmatpush1.bf16.msra.mxu0 0
    %523 = vmatprep.subr.bf16.mxu0 0
    %524 = vmatpush1.bf16.msra.mxu0 0
    %525 = vmatprep.subr.bf16.mxu0 0
    %526 = vmatpush1.bf16.msra.mxu0 0
    %527 = vmatprep.subr.bf16.mxu0 0
    %528 = vmatpush1.bf16.msra.mxu0 0
    %529 = vmatprep.subr.bf16.mxu0 0
    %530 = vmatpush1.bf16.msra.mxu0 0
    %531 = vmatprep.subr.bf16.mxu0 0
    %532 = vmatpush1.bf16.msra.mxu0 0
    %533 = vmatprep.subr.bf16.mxu0 0
    %534 = vmatpush1.bf16.msra.mxu0 0
    %535 = vmatprep.mubr.bf16.mxu0 0
    %536 = vmatmul.mubr.bf16.gmra.mrb[0].mxu0 %v437
    %v537 = vpop.f32.mrb[0].mxu0
    %v538 = vadd.f32 %v454, %v537
    %v539 = vpop.f32.mrb[0].mxu0
    %v540 = vpop.f32.mrb[0].mxu0
    %v541 = vpop.f32.mrb[0].mxu0
    %542 = vdwg.mxu0
    %vm543 = vcmask 24576
    %544 = vst.msk [vmem:[#allocation4] sm:$0x1] %vm543, %v538
    // Predicated region
    $region22: #{tpu_custom_call.1} parent=1 // pred_check
      _
    $region23: #{tpu_custom_call.1} parent=1 // pred_check_branch
      %546 = sbr.rel (0) target = $region25
    $region24: #{tpu_custom_call.1} parent=1 // pred_region
      %s548 = ssub.s32 32, 32
      %549 = vsyncadd [#allocation3], %s548
      %s551 = sshll.u32 [#allocation2], 4
      %s552 = int_to_ptr.vmem [resolvable:$true] %s551
      %554 = dma.vmem_to_hbm [thread:$0]  %s552, 32, %s5, [#allocation3]
    $region25: #{tpu_custom_call.1} parent=1 // pred_fallthru
      _
    // Predicated region
    $region26: #{tpu_custom_call.1} parent=1 // pred_check
      _
    $region27: #{tpu_custom_call.1} parent=1 // pred_check_branch
      %556 = sbr.rel (0) target = $region29
    $region28: #{tpu_custom_call.1} parent=1 // pred_region
      %s558 = ssub.s32 16, 16
      %559 = vsyncadd [#allocation5], %s558
      %s561 = sshll.u32 [#allocation4], 4
      %s562 = int_to_ptr.vmem [resolvable:$true] %s561
      %564 = dma.vmem_to_hbm [thread:$0]  %s562, 16, %s6, [#allocation5]
    $region29: #{tpu_custom_call.1} parent=1 // pred_fallthru
      _
    // Predicated region
    $region30: #{tpu_custom_call.1} parent=1 // pred_check
      _
    $region31: #{tpu_custom_call.1} parent=1 // pred_check_branch
      %566 = sbr.rel (0) target = $region33
    $region32: #{tpu_custom_call.1} parent=1 // pred_region
      %567 = dma.done [#allocation3], 32
    $region33: #{tpu_custom_call.1} parent=1 // pred_fallthru
      _
    // Predicated region
    $region34: #{tpu_custom_call.1} parent=1 // pred_check
      _
    $region35: #{tpu_custom_call.1} parent=1 // pred_check_branch
      %569 = sbr.rel (0) target = $region37
    $region36: #{tpu_custom_call.1} parent=1 // pred_region
      %570 = dma.done [#allocation5], 16
    $region37: #{tpu_custom_call.1} parent=1 // pred_fallthru
      _
    %571 = vsyncpa [#allocation3], 1
    %572 = vsyncpa [#allocation5], 1

</llo_original>
